<compile_context>
chip_gen: v7x
topology: tpu7x:2x2x1
jax: 0.10.0
libtpu: 0.0.40
codegen_flags: <defaults>
</compile_context>

<pallas_src>
import jax
import jax.numpy as jnp
from jax.experimental import pallas as pl
from jax.experimental.pallas import tpu as pltpu


# ----------------------------- Pallas kernel ------------------------------

def _make_conv_pool_kernel(nb, wp):
    """Fused Conv2d(k=(1,3), pad=(0,1)) + bias + MaxPool2d((1,2)) for `nb` samples.

    Layouts (channels-first, H * (W/2) flattened onto the lane axis):
      xe_ref : (nb, C_in, HWp)   even input columns  x[..., 0::2]   (bf16)
      xo_ref : (nb, C_in, HWp)   odd  input columns  x[..., 1::2]   (bf16)
      w_ref  : (C_out, 3*C_in)   conv taps, columns grouped [W_k0 | W_k1 | W_k2]  (bf16)
      b_ref  : (C_out, 1)        bias (f32)
      o_ref  : (nb, C_out, HWp)  pooled output (f32)
    """

    def kernel(xe_ref, xo_ref, w_ref, b_ref, o_ref):
        c_in, hwp = xe_ref.shape[1], xe_ref.shape[2]
        # Per-row boundary masks, built in-kernel (W is static): a couple of VPU ops.
        pos = jax.lax.broadcasted_iota(jnp.int32, (1, hwp), 1)
        row_start = (pos % wp) == 0            # w == 0      -> left zero pad
        row_end = (pos % wp) == (wp - 1)       # w == W - 1  -> right zero pad

        w = w_ref[...]                          # (C_out, 3*C_in), resident
        b = b_ref[...]                          # (C_out, 1), f32

        for s in range(nb):                     # static unroll over the batch block
            xe = xe_ref[s]                      # x[..., 2j]       (C_in, HWp)
            xo = xo_ref[s]                      # x[..., 2j + 1]
            dt = xe.dtype
            zc = jnp.zeros((c_in, 1), dt)

            # Shifted neighbours with per-row zero padding:
            #   xo_l[j] = x[..., 2j - 1],  xe_r[j] = x[..., 2j + 2]
            xo_l = jnp.where(row_start, jnp.zeros((), dt),
                             jnp.concatenate([zc, xo[:, : hwp - 1]], axis=1))
            xe_r = jnp.where(row_end, jnp.zeros((), dt),
                             jnp.concatenate([xe[:, 1:], zc], axis=1))

            # One fused MXU matmul; output columns = [conv at even w | conv at odd w].
            a = jnp.concatenate(
                [jnp.concatenate([xo_l, xe, xo], axis=0),   # taps for w = 2j
                 jnp.concatenate([xe, xo, xe_r], axis=0)],   # taps for w = 2j + 1
                axis=1)                                      # (3*C_in, 2*HWp)
            y = jnp.dot(w, a, preferred_element_type=jnp.float32)   # (C_out, 2*HWp) f32

            # MaxPool2d((1, 2)) == elementwise max of the two phases; bias/max in f32.
            o_ref[s] = jnp.maximum(y[:, :hwp], y[:, hwp:]) + b

    return kernel


# ----------------------------- Python wrapper ------------------------------

def _pick_batch_block(n):
    # Amortize the ~0.35us per-grid-step overhead while keeping >= 2 parallel grid steps
    # (v7x megacore).  For the test shape (N=2) this is 1 sample per step / 2 steps.
    if n <= 2:
        return 1
    for nb in range(min(n // 2, 8), 0, -1):
        if n % nb == 0:
            return nb
    return 1


def dance_conv_block(x, weight, bias, *, kernel_size=(1, 3), padding=(0, 1),
                     pooling_kernel=(1, 2), stride=1, mxu_dtype=jnp.bfloat16):
    """x: (N, C_in, H, W) f32.  weight: (C_out, C_in, 1, 3).  Returns (N, C_out, H, W//2)."""
    N, C_in, H, W = x.shape
    C_out, C_in_w, KH, KW = weight.shape
    assert C_in_w == C_in
    assert (KH, KW) == tuple(kernel_size) == (1, 3)
    assert tuple(padding) == (0, 1) and stride == 1
    assert tuple(pooling_kernel) == (1, 2)
    # TODO(synk): generalize to odd W / KH > 1 / other strides & pool sizes; the module
    # defaults (kernel (1,3), padding (0,1), pooling (1,2), stride 1) are what is implemented.
    assert W % 2 == 0
    Wp = W // 2
    HWp = H * Wp

    nb = _pick_batch_block(N)
    grid = N // nb

    # Wrapper-side layout plumbing: deinterleave W into even / odd columns so the kernel
    # works directly at the pooled width; cast MXU operands to bf16 (halves input DMA).
    xe = x[..., 0::2].reshape(N, C_in, HWp).astype(mxu_dtype)
    xo = x[..., 1::2].reshape(N, C_in, HWp).astype(mxu_dtype)
    # (C_out, C_in, 1, 3) -> (C_out, 3*C_in); column groups ordered by tap [k=0 | k=1 | k=2].
    w_flat = jnp.transpose(weight[:, :, 0, :], (0, 2, 1)).reshape(C_out, 3 * C_in)
    w_flat = w_flat.astype(mxu_dtype)
    b_col = bias.reshape(C_out, 1).astype(jnp.float32)

    flops = 2 * N * C_out * (3 * C_in) * (2 * HWp) + 3 * N * C_out * HWp
    bytes_accessed = int((xe.size + xo.size + w_flat.size) * jnp.dtype(mxu_dtype).itemsize
                         + (b_col.size + N * C_out * HWp) * 4)

    out_flat = pl.pallas_call(
        _make_conv_pool_kernel(nb, Wp),
        out_shape=jax.ShapeDtypeStruct((N, C_out, HWp), jnp.float32),
        grid_spec=pltpu.PrefetchScalarGridSpec(
            num_scalar_prefetch=0,
            grid=(grid,),
            in_specs=[
                pl.BlockSpec((nb, C_in, HWp), lambda n: (n, 0, 0)),
                pl.BlockSpec((nb, C_in, HWp), lambda n: (n, 0, 0)),
                pl.BlockSpec((C_out, 3 * C_in), lambda n: (0, 0)),   # resident constant
                pl.BlockSpec((C_out, 1), lambda n: (0, 0)),           # resident constant
            ],
            out_specs=pl.BlockSpec((nb, C_out, HWp), lambda n: (n, 0, 0)),
        ),
        compiler_params=pltpu.CompilerParams(
            dimension_semantics=("parallel",),
            vmem_limit_bytes=32 * 1024 * 1024,
        ),
        cost_estimate=pl.CostEstimate(
            flops=flops, transcendentals=0, bytes_accessed=bytes_accessed),
    )(xe, xo, w_flat, b_col)

    # (N, C_out, H*Wp) -> (N, C_out, H, Wp) is a contiguous reshape (no data movement).
    return out_flat.reshape(N, C_out, H, Wp)


# --------------------------- reference (pure JAX) ---------------------------

def _reference(x, weight, bias):
    conv = jax.lax.conv_general_dilated(
        x, weight, window_strides=(1, 1), padding=((0, 0), (1, 1)),
        dimension_numbers=("NCHW", "OIHW", "NCHW"))
    conv = conv + bias[None, :, None, None]
    return jax.lax.reduce_window(
        conv, -jnp.inf, jax.lax.max,
        window_dimensions=(1, 1, 1, 2), window_strides=(1, 1, 1, 2),
        padding="VALID")


if __name__ == "__main__":
    N, C_in, H, W = 2, 4, 16, 16
    C_out = 8

    key = jax.random.PRNGKey(0)
    k1, k2, k3 = jax.random.split(key, 3)
    x = jax.random.normal(k1, (N, C_in, H, W), dtype=jnp.float32)
    weight = 0.1 * jax.random.normal(k2, (C_out, C_in, 1, 3), dtype=jnp.float32)
    bias = 0.1 * jax.random.normal(k3, (C_out,), dtype=jnp.float32)

    fused = jax.jit(dance_conv_block)
    out = fused(x, weight, bias)
    out = jax.block_until_ready(out)

    ref = _reference(x, weight, bias)
    assert out.shape == ref.shape == (N, C_out, H, W // 2), (out.shape, ref.shape)
    max_err = float(jnp.max(jnp.abs(out - ref)))
    assert jnp.allclose(out, ref, atol=2e-2, rtol=2e-2), max_err

    print("KERNEL_OK")
</pallas_src>

<mosaic_0001>
module attributes {stable_mosaic.version = 11 : i64} {
  func.func @kernel(%arg0: i32, %arg1: memref<1x4x128xbf16, #tpu.memory_space<vmem>>, %arg2: memref<1x4x128xbf16, #tpu.memory_space<vmem>>, %arg3: memref<8x12xbf16, #tpu.memory_space<vmem>>, %arg4: memref<8x1xf32, #tpu.memory_space<vmem>>, %arg5: memref<1x8x128xf32, #tpu.memory_space<vmem>>) attributes {dimension_semantics = [#tpu.dimension_semantics<parallel>], iteration_bounds = array<i64: 2>, scalar_prefetch = 0 : i64, scratch_operands = 0 : i64, tpu.core_type = #tpu.core_type<tc>, window_params = [{transform_indices = @transform_0, window_bounds = array<i64: 1, 4, 128>}, {transform_indices = @transform_1, window_bounds = array<i64: 1, 4, 128>}, {pipeline_mode = #tpu.pipeline_mode<synchronous>, transform_indices = @transform_2, window_bounds = array<i64: 8, 12>}, {pipeline_mode = #tpu.pipeline_mode<synchronous>, transform_indices = @transform_3, window_bounds = array<i64: 8, 1>}, {transform_indices = @transform_4, window_bounds = array<i64: 1, 8, 128>}]} {
    %0 = tpu.iota {dimensions = array<i32: 1>} : vector<1x128xi32>
    %c8_i32 = arith.constant 8 : i32
    %c0_i32 = arith.constant 0 : i32
    %1 = arith.cmpi eq, %c8_i32, %c0_i32 : i32
    %c1_i32 = arith.constant 1 : i32
    %2 = arith.select %1, %c1_i32, %c8_i32 : i32
    %3 = vector.broadcast %2 : i32 to vector<1x128xi32>
    %4 = arith.remsi %0, %3 : vector<1x128xi32>
    %c0_i32_0 = arith.constant 0 : i32
    %5 = vector.broadcast %c0_i32_0 : i32 to vector<1x128xi32>
    %6 = arith.cmpi ne, %4, %5 : vector<1x128xi32>
    %c0_i32_1 = arith.constant 0 : i32
    %7 = vector.broadcast %c0_i32_1 : i32 to vector<1x128xi32>
    %8 = arith.cmpi slt, %4, %7 : vector<1x128xi32>
    %c0_i32_2 = arith.constant 0 : i32
    %9 = arith.cmpi slt, %2, %c0_i32_2 : i32
    %10 = vector.broadcast %9 : i1 to vector<1x128xi1>
    %11 = vector.broadcast %10 : vector<1x128xi1> to vector<1x128xi1>
    %12 = arith.xori %8, %11 : vector<1x128xi1>
    %13 = arith.andi %12, %6 : vector<1x128xi1>
    %14 = vector.broadcast %2 : i32 to vector<1x128xi32>
    %15 = arith.addi %4, %14 : vector<1x128xi32>
    %16 = arith.select %13, %15, %4 : vector<1x128xi1>, vector<1x128xi32>
    %c0_i32_3 = arith.constant 0 : i32
    %17 = vector.broadcast %c0_i32_3 : i32 to vector<1x128xi32>
    %18 = arith.cmpi eq, %16, %17 : vector<1x128xi32>
    %c8_i32_4 = arith.constant 8 : i32
    %c0_i32_5 = arith.constant 0 : i32
    %19 = arith.cmpi eq, %c8_i32_4, %c0_i32_5 : i32
    %c1_i32_6 = arith.constant 1 : i32
    %20 = arith.select %19, %c1_i32_6, %c8_i32_4 : i32
    %21 = vector.broadcast %20 : i32 to vector<1x128xi32>
    %22 = arith.remsi %0, %21 : vector<1x128xi32>
    %c0_i32_7 = arith.constant 0 : i32
    %23 = vector.broadcast %c0_i32_7 : i32 to vector<1x128xi32>
    %24 = arith.cmpi ne, %22, %23 : vector<1x128xi32>
    %c0_i32_8 = arith.constant 0 : i32
    %25 = vector.broadcast %c0_i32_8 : i32 to vector<1x128xi32>
    %26 = arith.cmpi slt, %22, %25 : vector<1x128xi32>
    %c0_i32_9 = arith.constant 0 : i32
    %27 = arith.cmpi slt, %20, %c0_i32_9 : i32
    %28 = vector.broadcast %27 : i1 to vector<1x128xi1>
    %29 = vector.broadcast %28 : vector<1x128xi1> to vector<1x128xi1>
    %30 = arith.xori %26, %29 : vector<1x128xi1>
    %31 = arith.andi %30, %24 : vector<1x128xi1>
    %32 = vector.broadcast %20 : i32 to vector<1x128xi32>
    %33 = arith.addi %22, %32 : vector<1x128xi32>
    %34 = arith.select %31, %33, %22 : vector<1x128xi1>, vector<1x128xi32>
    %c7_i32 = arith.constant 7 : i32
    %35 = vector.broadcast %c7_i32 : i32 to vector<1x128xi32>
    %36 = arith.cmpi eq, %34, %35 : vector<1x128xi32>
    %c0 = arith.constant 0 : index
    %c0_10 = arith.constant 0 : index
    %37 = vector.load %arg3[%c0, %c0_10] : memref<8x12xbf16, #tpu.memory_space<vmem>>, vector<8x12xbf16>
    %c0_11 = arith.constant 0 : index
    %c0_12 = arith.constant 0 : index
    %38 = vector.load %arg4[%c0_11, %c0_12] : memref<8x1xf32, #tpu.memory_space<vmem>>, vector<8x1xf32>
    %c0_13 = arith.constant 0 : index
    %c0_14 = arith.constant 0 : index
    %c0_15 = arith.constant 0 : index
    %39 = vector.load %arg1[%c0_13, %c0_14, %c0_15] : memref<1x4x128xbf16, #tpu.memory_space<vmem>>, vector<1x4x128xbf16>
    %40 = vector.shape_cast %39 : vector<1x4x128xbf16> to vector<4x128xbf16>
    %c0_16 = arith.constant 0 : index
    %c0_17 = arith.constant 0 : index
    %c0_18 = arith.constant 0 : index
    %41 = vector.load %arg2[%c0_16, %c0_17, %c0_18] : memref<1x4x128xbf16, #tpu.memory_space<vmem>>, vector<1x4x128xbf16>
    %42 = vector.shape_cast %41 : vector<1x4x128xbf16> to vector<4x128xbf16>
    %cst = arith.constant 0.000000e+00 : bf16
    %43 = vector.broadcast %cst : bf16 to vector<4x1xbf16>
    %44 = vector.extract_strided_slice %42 {offsets = [0, 0], sizes = [4, 127], strides = [1, 1]} : vector<4x128xbf16> to vector<4x127xbf16>
    %45 = tpu.concatenate %43, %44 in 1 : vector<4x1xbf16>, vector<4x127xbf16> -> vector<4x128xbf16>
    %cst_19 = arith.constant 0.000000e+00 : bf16
    %46 = vector.shape_cast %18 : vector<1x128xi1> to vector<1x128xi1>
    %47 = vector.broadcast %46 : vector<1x128xi1> to vector<4x128xi1>
    %48 = vector.broadcast %cst_19 : bf16 to vector<4x128xbf16>
    %49 = arith.select %47, %48, %45 : vector<4x128xi1>, vector<4x128xbf16>
    %50 = vector.extract_strided_slice %40 {offsets = [0, 1], sizes = [4, 127], strides = [1, 1]} : vector<4x128xbf16> to vector<4x127xbf16>
    %51 = tpu.concatenate %50, %43 in 1 : vector<4x127xbf16>, vector<4x1xbf16> -> vector<4x128xbf16>
    %cst_20 = arith.constant 0.000000e+00 : bf16
    %52 = vector.shape_cast %36 : vector<1x128xi1> to vector<1x128xi1>
    %53 = vector.broadcast %52 : vector<1x128xi1> to vector<4x128xi1>
    %54 = vector.broadcast %cst_20 : bf16 to vector<4x128xbf16>
    %55 = arith.select %53, %54, %51 : vector<4x128xi1>, vector<4x128xbf16>
    %56 = tpu.concatenate %49, %40, %42 in 0 : vector<4x128xbf16>, vector<4x128xbf16>, vector<4x128xbf16> -> vector<12x128xbf16>
    %57 = tpu.concatenate %40, %42, %55 in 0 : vector<4x128xbf16>, vector<4x128xbf16>, vector<4x128xbf16> -> vector<12x128xbf16>
    %58 = tpu.concatenate %56, %57 in 1 : vector<12x128xbf16>, vector<12x128xbf16> -> vector<12x256xbf16>
    %cst_21 = arith.constant dense<0.000000e+00> : vector<8x256xf32>
    %59 = tpu.matmul %37, %58, %cst_21 {dimension_numbers = #tpu.dot_dimension_numbers<[1], [0], [0], [1], [0, 0, 1, 1], [], []>} : vector<8x12xbf16>, vector<12x256xbf16>, vector<8x256xf32> -> vector<8x256xf32>
    %60 = vector.extract_strided_slice %59 {offsets = [0, 0], sizes = [8, 128], strides = [1, 1]} : vector<8x256xf32> to vector<8x128xf32>
    %61 = vector.extract_strided_slice %59 {offsets = [0, 128], sizes = [8, 128], strides = [1, 1]} : vector<8x256xf32> to vector<8x128xf32>
    %62 = arith.maximumf %60, %61 : vector<8x128xf32>
    %63 = vector.broadcast %38 : vector<8x1xf32> to vector<8x128xf32>
    %64 = arith.addf %62, %63 : vector<8x128xf32>
    %c0_22 = arith.constant 0 : index
    %c0_23 = arith.constant 0 : index
    %c0_24 = arith.constant 0 : index
    %65 = vector.load %arg5[%c0_22, %c0_23, %c0_24] : memref<1x8x128xf32, #tpu.memory_space<vmem>>, vector<1x8x128xf32>
    %66 = vector.shape_cast %65 : vector<1x8x128xf32> to vector<8x128xf32>
    %67 = vector.shape_cast %64 : vector<8x128xf32> to vector<1x8x128xf32>
    tpu.vector_store %arg5[%c0_22, %c0_23, %c0_24], %67 {strides = array<i32>} : memref<1x8x128xf32, #tpu.memory_space<vmem>>, vector<1x8x128xf32>,
    return
  }
  func.func @transform_0(%arg0: i32) -> (i32, i32, i32) {
    %c0_i32 = arith.constant 0 : i32
    %c0_i32_0 = arith.constant 0 : i32
    %c0_i32_1 = arith.constant 0 : i32
    return %arg0, %c0_i32, %c0_i32_0 : i32, i32, i32
  }
  func.func @transform_1(%arg0: i32) -> (i32, i32, i32) {
    %c0_i32 = arith.constant 0 : i32
    %c0_i32_0 = arith.constant 0 : i32
    %c0_i32_1 = arith.constant 0 : i32
    return %arg0, %c0_i32, %c0_i32_0 : i32, i32, i32
  }
  func.func @transform_2(%arg0: i32) -> (i32, i32) {
    %c0_i32 = arith.constant 0 : i32
    %c0_i32_0 = arith.constant 0 : i32
    %c0_i32_1 = arith.constant 0 : i32
    return %c0_i32, %c0_i32_0 : i32, i32
  }
  func.func @transform_3(%arg0: i32) -> (i32, i32) {
    %c0_i32 = arith.constant 0 : i32
    %c0_i32_0 = arith.constant 0 : i32
    %c0_i32_1 = arith.constant 0 : i32
    return %c0_i32, %c0_i32_0 : i32, i32
  }
  func.func @transform_4(%arg0: i32) -> (i32, i32, i32) {
    %c0_i32 = arith.constant 0 : i32
    %c0_i32_0 = arith.constant 0 : i32
    %c0_i32_1 = arith.constant 0 : i32
    return %arg0, %c0_i32, %c0_i32_0 : i32, i32, i32
  }
}

</mosaic_0001>

<llo_original>
// kernel: dance_conv_block.1
$region0: #{dance_conv_block.1}
  #allocation0 [shape = 'u32[]', space=smem, size = 0x4, offset = 0x4, fixed_abs, tag = 'smem constant byte address 0x4 - core index']
  #allocation1 [shape = 'u32[144,128]{1,0:T(1,128)}', space=vmem, size = 0x12000, scoped, tag = 'internal scratch']
  %s0 = inlined_call_operand.vmem [shape: bf16[2,4,128], index: 0, kind: input, shape index: {}]
  %s1 = inlined_call_operand.vmem [shape: bf16[2,4,128], index: 1, kind: input, shape index: {}]
  %s2 = inlined_call_operand.vmem [shape: bf16[8,12], index: 2, kind: input, shape index: {}]
  %s3 = inlined_call_operand.vmem [shape: f32[8,1], index: 3, kind: input, shape index: {}]
  %s4 = inlined_call_operand.vmem [shape: f32[2,8,128], index: 4, kind: output, shape index: {}]
  %s5 = sld [smem:[#allocation0]]
  $region49: #{dance_conv_block.1} parent=0
    _
  %s7 = ssub.s32 1, %s5
  %s8 = scalar_select 0, %s7, %s5
  loop: start=0, step=1, limit=4
  $region2: #{dance_conv_block.1} parent=0 // loop_pre_header
    _
  $region3: #{dance_conv_block.1} parent=0 // loop_header
    %s10 = sphi 0, %s14
    %p11 = scmp.ge.s32.totalorder %s10, 4
    %s20 = sphi 0, %s22
    %s23 = sphi 0, %s20
    %s24 = sphi 0, %s23
    %s40 = sphi 0, %s24
    %s46 = sphi 0, %s48
    %s49 = sphi 0, %s46
    %s50 = sphi 0, %s49
    %s66 = sphi 0, %s50
    %s70 = sphi 0, %s70
    %s72 = sphi 0, %s70
    %s73 = sphi 0, %s72
    %s87 = sphi 0, %s73
    %s91 = sphi 0, %s91
    %s93 = sphi 0, %s91
    %s94 = sphi 0, %s93
    %s108 = sphi 0, %s94
    %s114 = sphi 0, %s116
    %s117 = sphi 0, %s114
    %s118 = sphi 0, %s117
    %s134 = sphi 0, %s118
  $region4: #{dance_conv_block.1} parent=0 // loop_header_branch
    %13 = sbr.rel (%p11) target = $region8
  $region5: #{dance_conv_block.1} parent=0 // loop_body
    %s15 = ssub.s32 %s10, 1
    %s16 = ssub.s32 %s10, 2
    %s17 = sadd.s32 %s10, 1
    %s18 = ssub.s32 %s10, %s17
    %p19 = scmp.eq.s32.totalorder %s18, 0
    %s21 = sadd.s32 %s20, 1
    %s22 = scalar_select %p19, %s20, %s21
    %p25 = pneg %p19
    %p26 = scmp.eq.s32.totalorder %s10, 1
    %p27 = por %p25, %p26
    %p28 = scmp.ne.s32.totalorder %s20, %s23
    %p29 = scmp.eq.s32.totalorder %s10, 0
    %p30 = por %p28, %p29
    %p31 = scmp.ne.s32.totalorder %s20, %s23
    %p32 = scmp.eq.s32.totalorder %s15, 1
    %p33 = por %p31, %p32
    %p34 = scmp.ne.s32.totalorder %s23, %s24
    %p35 = scmp.eq.s32.totalorder %s15, 0
    %p36 = por %p34, %p35
    %p37 = scmp.ne.s32.totalorder %s23, %s24
    %p38 = scmp.eq.s32.totalorder %s16, 1
    %p39 = por %p37, %p38
    %p41 = scmp.ne.s32.totalorder %s24, %s40
    %p42 = scmp.eq.s32.totalorder %s16, 0
    %p43 = por %p41, %p42
    %s44 = ssub.s32 %s10, %s17
    %p45 = scmp.eq.s32.totalorder %s44, 0
    %s47 = sadd.s32 %s46, 1
    %s48 = scalar_select %p45, %s46, %s47
    %p51 = pneg %p45
    %p52 = scmp.eq.s32.totalorder %s10, 1
    %p53 = por %p51, %p52
    %p54 = scmp.ne.s32.totalorder %s46, %s49
    %p55 = scmp.eq.s32.totalorder %s10, 0
    %p56 = por %p54, %p55
    %p57 = scmp.ne.s32.totalorder %s46, %s49
    %p58 = scmp.eq.s32.totalorder %s15, 1
    %p59 = por %p57, %p58
    %p60 = scmp.ne.s32.totalorder %s49, %s50
    %p61 = scmp.eq.s32.totalorder %s15, 0
    %p62 = por %p60, %p61
    %p63 = scmp.ne.s32.totalorder %s49, %s50
    %p64 = scmp.eq.s32.totalorder %s16, 1
    %p65 = por %p63, %p64
    %p67 = scmp.ne.s32.totalorder %s50, %s66
    %p68 = scmp.eq.s32.totalorder %s16, 0
    %p69 = por %p67, %p68
    %s71 = sadd.s32 %s70, 1
    %p74 = scmp.eq.s32.totalorder %s10, 1
    %p75 = scmp.ne.s32.totalorder %s70, %s72
    %p76 = scmp.eq.s32.totalorder %s10, 0
    %p77 = por %p75, %p76
    %p78 = scmp.ne.s32.totalorder %s70, %s72
    %p79 = scmp.eq.s32.totalorder %s15, 1
    %p80 = por %p78, %p79
    %p81 = scmp.ne.s32.totalorder %s72, %s73
    %p82 = scmp.eq.s32.totalorder %s15, 0
    %p83 = por %p81, %p82
    %p84 = scmp.ne.s32.totalorder %s72, %s73
    %p85 = scmp.eq.s32.totalorder %s16, 1
    %p86 = por %p84, %p85
    %p88 = scmp.ne.s32.totalorder %s73, %s87
    %p89 = scmp.eq.s32.totalorder %s16, 0
    %p90 = por %p88, %p89
    %s92 = sadd.s32 %s91, 1
    %p95 = scmp.eq.s32.totalorder %s10, 1
    %p96 = scmp.ne.s32.totalorder %s91, %s93
    %p97 = scmp.eq.s32.totalorder %s10, 0
    %p98 = por %p96, %p97
    %p99 = scmp.ne.s32.totalorder %s91, %s93
    %p100 = scmp.eq.s32.totalorder %s15, 1
    %p101 = por %p99, %p100
    %p102 = scmp.ne.s32.totalorder %s93, %s94
    %p103 = scmp.eq.s32.totalorder %s15, 0
    %p104 = por %p102, %p103
    %p105 = scmp.ne.s32.totalorder %s93, %s94
    %p106 = scmp.eq.s32.totalorder %s16, 1
    %p107 = por %p105, %p106
    %p109 = scmp.ne.s32.totalorder %s94, %s108
    %p110 = scmp.eq.s32.totalorder %s16, 0
    %p111 = por %p109, %p110
    %s112 = ssub.s32 %s10, %s17
    %p113 = scmp.eq.s32.totalorder %s112, 0
    %s115 = sadd.s32 %s114, 1
    %s116 = scalar_select %p113, %s114, %s115
    %p119 = pneg %p113
    %p120 = scmp.eq.s32.totalorder %s10, 1
    %p121 = por %p119, %p120
    %p122 = scmp.ne.s32.totalorder %s114, %s117
    %p123 = scmp.eq.s32.totalorder %s10, 0
    %p124 = por %p122, %p123
    %p125 = scmp.ne.s32.totalorder %s114, %s117
    %p126 = scmp.eq.s32.totalorder %s15, 1
    %p127 = por %p125, %p126
    %p128 = scmp.ne.s32.totalorder %s117, %s118
    %p129 = scmp.eq.s32.totalorder %s15, 0
    %p130 = por %p128, %p129
    %p131 = scmp.ne.s32.totalorder %s117, %s118
    %p132 = scmp.eq.s32.totalorder %s16, 1
    %p133 = por %p131, %p132
    %p135 = scmp.ne.s32.totalorder %s118, %s134
    %p136 = scmp.eq.s32.totalorder %s16, 0
    %p137 = por %p135, %p136
    %p138 = scmp.le.s32.totalorder 1, %s10
    %p139 = scmp.lt.s32.totalorder %s10, 3
    %p140 = pnand %p138, %p139
    %p141 = pneg %p140
    // Predicated region
    $region9: #{dance_conv_block.1} parent=5 // pred_check
      _
    $region10: #{dance_conv_block.1} parent=5 // pred_check_branch
      %143 = sbr.rel (%p140) target = $region12
    $region11: #{dance_conv_block.1} parent=5 // pred_region
      %s144 = ssub.s32 %s10, 1
      // Predicated region
      $region13: #{dance_conv_block.1} parent=11 // pred_check
        %p145 = pneg %p83
      $region14: #{dance_conv_block.1} parent=11 // pred_check_branch
        %147 = sbr.rel (%p145) target = $region16
      $region15: #{dance_conv_block.1} parent=11 // pred_region
        _
      $region16: #{dance_conv_block.1} parent=11 // pred_fallthru
        _
      // Predicated region
      $region17: #{dance_conv_block.1} parent=11 // pred_check
        %p148 = pneg %p104
      $region18: #{dance_conv_block.1} parent=11 // pred_check_branch
        %150 = sbr.rel (%p148) target = $region20
      $region19: #{dance_conv_block.1} parent=11 // pred_region
        _
      $region20: #{dance_conv_block.1} parent=11 // pred_fallthru
        _
    $region12: #{dance_conv_block.1} parent=5 // pred_fallthru
      _
    %p151 = scmp.lt.s32.totalorder %s10, 2
    // Predicated region
    $region21: #{dance_conv_block.1} parent=5 // pred_check
      %p152 = pneg %p151
    $region22: #{dance_conv_block.1} parent=5 // pred_check_branch
      %154 = sbr.rel (%p152) target = $region24
    $region23: #{dance_conv_block.1} parent=5 // pred_region
      // Predicated region
      $region25: #{dance_conv_block.1} parent=23 // pred_check
        %p155 = pneg %p30
      $region26: #{dance_conv_block.1} parent=23 // pred_check_branch
        %157 = sbr.rel (%p155) target = $region28
      $region27: #{dance_conv_block.1} parent=23 // pred_region
        %p158 = scmp.lt.s32.totalorder %s10, 1
        %s159 = scalar_select %p158, %s10, 1
        %s160 = smul.addr %s159, 2
        %s161 = scalar_lea.vmem %s0, %s160
      $region28: #{dance_conv_block.1} parent=23 // pred_fallthru
        _
      // Predicated region
      $region29: #{dance_conv_block.1} parent=23 // pred_check
        %p162 = pneg %p56
      $region30: #{dance_conv_block.1} parent=23 // pred_check_branch
        %164 = sbr.rel (%p162) target = $region32
      $region31: #{dance_conv_block.1} parent=23 // pred_region
        %p165 = scmp.lt.s32.totalorder %s10, 1
        %s166 = scalar_select %p165, %s10, 1
        %s167 = smul.addr %s166, 2
        %s168 = scalar_lea.vmem %s1, %s167
      $region32: #{dance_conv_block.1} parent=23 // pred_fallthru
        _
    $region24: #{dance_conv_block.1} parent=5 // pred_fallthru
      _
    %p169 = scmp.le.s32.totalorder 1, %s10
    %p170 = scmp.lt.s32.totalorder %s10, 3
    %p171 = pnand %p169, %p170
    %p172 = pneg %p171
    // Predicated region
    $region33: #{dance_conv_block.1} parent=5 // pred_check
      _
    $region34: #{dance_conv_block.1} parent=5 // pred_check_branch
      %174 = sbr.rel (%p171) target = $region36
    $region35: #{dance_conv_block.1} parent=5 // pred_region
      %s175 = ssub.s32 %s10, 1
      %p176 = scmp.lt.s32.totalorder %s15, 1
      %s177 = scalar_select %p176, %s15, 1
      %s178 = smul.addr %s177, 2
      %s179 = scalar_lea.vmem %s0, %s178
      %p180 = pneg %p36
      %p181 = pneg %p33
      %p182 = scmp.lt.s32.totalorder %s15, 1
      %s183 = scalar_select %p182, %s15, 1
      %s184 = smul.addr %s183, 2
      %s185 = scalar_lea.vmem %s1, %s184
      %p186 = pneg %p62
      %p187 = pneg %p59
      %p188 = pneg %p83
      %p189 = pneg %p80
      %p190 = pneg %p104
      %p191 = pneg %p101
      %p192 = pneg %p130
      %p193 = pneg %p127
      %p194 = scmp.lt.s32.totalorder %s15, 1
      %s195 = scalar_select %p194, %s15, 1
      %s196 = smul.addr %s195, 8
      %s197 = scalar_lea.vmem %s4, %s196
      %p198 = scmp.lt.s32.totalorder %s15, 1
      %s199 = scalar_select %p198, %s15, 1
      %s200 = smul.addr %s199, 2
      %s201 = scalar_lea.vmem %s0, %s200
      %p202 = scmp.lt.s32.totalorder %s15, 1
      %s203 = scalar_select %p202, %s15, 1
      %s204 = smul.addr %s203, 2
      %s205 = scalar_lea.vmem %s1, %s204
      %p206 = scmp.lt.s32.totalorder %s15, 1
      %s207 = scalar_select %p206, %s15, 1
      %s208 = smul.addr %s207, 8
      %s209 = scalar_lea.vmem %s4, %s208
      %v211 = vlaneseq
      %v212 = vand.u32 %v211, 127
      %vm213 = vcmp.lt.s32.totalorder %v212, 0
      %v214 = vsub.s32 0, %v212
      %v215 = vsel %vm213, %v214, %v212
      %v216 = vshrl.u32 %v215, 3
      %v217 = vand.u32 %v215, 7
      %v218 = vsub.s32 0, %v217
      %v219 = vsel %vm213, %v218, %v217
      %vm220 = vcmp.ne.s32.totalorder %v219, 0
      %vm221 = vcmp.lt.s32.totalorder %v219, 0
      %vm222 = vmand %vm221, %vm220
      %v223 = vadd.s32 %v219, 8
      %v224 = vsel %vm222, %v223, %v219
      %vm225 = vcmp.eq.s32.totalorder %v224, 0
      %vm226 = vcmp.eq.s32.totalorder %v224, 7
      %v227 = vld [vmem:[%s2] sm:$0xf]
      %v228 = vld [vmem:[%s3] sm:$0xff]
      %v229 = vld [vmem:[%s201] sm:$0x3]
      %v230 = vld [vmem:[%s205] sm:$0x3]
      %v233 = vunpack.c.l.s4 1983009808
      %v234 = vunpack.c.0.s8 %v233
      %v235 = vlaneseq
      %v236 = vshrl.u32 %v235, 7
      %v237 = vsub.s32 %v234, %v236
      %v238 = vrot.slane %v230, %v237
      %239 = vrot.lane.b32.xlu0 %v238, 1
      %v240 = vpop.permute.xlu0 %239
      %vm241 = vcmask 7168
      %v244 = vsel %vm241, 0, %v240
      %v246 = vsel %vm225, 1, 0
      %vm247 = vcmp.eq.s32.totalorder %v246, 1
      %vm248 = vmpackc.low %vm247, %vm247
      %v249 = vsel %vm248, 0, %v244
      %v252 = vunpack.c.l.s4 1983009808
      %v253 = vunpack.c.0.s8 %v252
      %v254 = vlaneseq
      %v255 = vshrl.u32 %v254, 7
      %v256 = vsub.s32 %v253, %v255
      %v257 = vrot.slane %v229, %v256
      %258 = vrot.lane.b32.xlu0 %v257, 127
      %v259 = vpop.permute.xlu0 %258
      %vm260 = vcmask 1039360
      %v262 = vsel %vm260, %v259, 0
      %v264 = vsel %vm226, 1, 0
      %vm265 = vcmp.eq.s32.totalorder %v264, 1
      %vm266 = vmpackc.low %vm265, %vm265
      %v267 = vsel %vm266, 0, %v262
      %v268 = vcombine.low %v229, %v229
      %v270 = vunpack.c.l.s4 1983009808
      %v271 = vunpack.c.0.s8 %v270
      %v272 = vlaneseq
      %v273 = vshrl.u32 %v272, 7
      %v274 = vsub.s32 %v271, %v273
      %v275 = vrot.slane %v268, %v274
      %v276 = vcombine.low %v238, %v238
      %vm277 = vcmask 1041408
      %v280 = vsel %vm277, %v249, %v275
      %vm281 = vcmask 1043456
      %v283 = vsel %vm281, %v280, %v276
      %v284 = vcombine.low %v230, %v230
      %v286 = vunpack.c.l.s4 1983009808
      %v287 = vunpack.c.0.s8 %v286
      %v288 = vlaneseq
      %v289 = vshrl.u32 %v288, 7
      %v290 = vsub.s32 %v287, %v289
      %v291 = vrot.slane %v284, %v290
      %v293 = vrot.slane %v267, 4
      %v296 = vsel %vm277, %v229, %v291
      %v298 = vsel %vm281, %v296, %v293
      %vm299 = vcmask 97280
      %v301 = vsel %vm299, %v227, 0
      %vm303 = vcmask 1045504
      %v304 = vsel %vm303, %v283, 0
      %v306 = vsel %vm303, %v298, 0
      %308 = vmatprep.subr.bf16.mxu0 %v306
      %309 = vmatpush1.bf16.msra.mxu0 %v304
      %310 = vmatprep.subr.bf16.mxu0 0
      %311 = vmatpush1.bf16.msra.mxu0 0
      %312 = vmatprep.subr.bf16.mxu0 0
      %313 = vmatpush1.bf16.msra.mxu0 0
      %314 = vmatprep.subr.bf16.mxu0 0
      %315 = vmatpush1.bf16.msra.mxu0 0
      %316 = vmatprep.subr.bf16.mxu0 0
      %317 = vmatpush1.bf16.msra.mxu0 0
      %318 = vmatprep.subr.bf16.mxu0 0
      %319 = vmatpush1.bf16.msra.mxu0 0
      %320 = vmatprep.subr.bf16.mxu0 0
      %321 = vmatpush1.bf16.msra.mxu0 0
      %322 = vmatprep.subr.bf16.mxu0 0
      %323 = vmatpush1.bf16.msra.mxu0 0
      %324 = vmatprep.subr.bf16.mxu0 0
      %325 = vmatpush1.bf16.msra.mxu0 0
      %326 = vmatprep.subr.bf16.mxu0 0
      %327 = vmatpush1.bf16.msra.mxu0 0
      %328 = vmatprep.subr.bf16.mxu0 0
      %329 = vmatpush1.bf16.msra.mxu0 0
      %330 = vmatprep.subr.bf16.mxu0 0
      %331 = vmatpush1.bf16.msra.mxu0 0
      %332 = vmatprep.subr.bf16.mxu0 0
      %333 = vmatpush1.bf16.msra.mxu0 0
      %334 = vmatprep.subr.bf16.mxu0 0
      %335 = vmatpush1.bf16.msra.mxu0 0
      %336 = vmatprep.subr.bf16.mxu0 0
      %337 = vmatpush1.bf16.msra.mxu0 0
      %338 = vmatprep.subr.bf16.mxu0 0
      %339 = vmatpush1.bf16.msra.mxu0 0
      %340 = vmatprep.mubr.bf16.mxu0 0
      %341 = vmatmul.mubr.bf16.gmra.mrb[0].mxu0 %v301
      %v342 = vpop.f32.mrb[0].mxu0
      %v343 = vadd.f32 0.0, %v342
      %v344 = vpop.f32.mrb[0].mxu0
      %v345 = vadd.f32 0.0, %v344
      %v346 = vpop.f32.mrb[0].mxu0
      %v347 = vpop.f32.mrb[0].mxu0
      %348 = vdwg.mxu0
      %v349 = vmax.f32 %v343, %v345
      %351 = vset.pattern.permute.xlu0 0
      %352 = vperm.xlu0 %351, %v228
      %v353 = vpop.permute.xlu0 %352
      %v355 = vadd.f32 %v349, %v353
      %356 = vst [vmem:[%s209] sm:$0xff] %v355
      %p357 = scmp.lt.s32.totalorder %s15, 1
      %s358 = scalar_select %p357, %s15, 1
      %s359 = smul.addr %s358, 8
      %s360 = scalar_lea.vmem %s4, %s359
      // Predicated region
      $region37: #{dance_conv_block.1} parent=35 // pred_check
        %p361 = pneg %p127
      $region38: #{dance_conv_block.1} parent=35 // pred_check_branch
        %363 = sbr.rel (%p361) target = $region40
      $region39: #{dance_conv_block.1} parent=35 // pred_region
        _
      $region40: #{dance_conv_block.1} parent=35 // pred_fallthru
        _
    $region36: #{dance_conv_block.1} parent=5 // pred_fallthru
      _
    %p364 = scmp.le.s32.totalorder 2, %s10
    // Predicated region
    $region41: #{dance_conv_block.1} parent=5 // pred_check
      %p365 = pneg %p364
    $region42: #{dance_conv_block.1} parent=5 // pred_check_branch
      %367 = sbr.rel (%p365) target = $region44
    $region43: #{dance_conv_block.1} parent=5 // pred_region
      %s368 = ssub.s32 %s10, 2
      // Predicated region
      $region45: #{dance_conv_block.1} parent=43 // pred_check
        %p369 = pneg %p133
      $region46: #{dance_conv_block.1} parent=43 // pred_check_branch
        %371 = sbr.rel (%p369) target = $region48
      $region47: #{dance_conv_block.1} parent=43 // pred_region
        %p372 = scmp.lt.s32.totalorder %s16, 1
        %s373 = scalar_select %p372, %s16, 1
        %s374 = smul.addr %s373, 8
        %s375 = scalar_lea.vmem %s4, %s374
      $region48: #{dance_conv_block.1} parent=43 // pred_fallthru
        _
    $region44: #{dance_conv_block.1} parent=5 // pred_fallthru
      _
  $region6: #{dance_conv_block.1} parent=0 // loop_footer
    %s14 = sadd.s32 1, %s10
  $region7: #{dance_conv_block.1} parent=0 // loop_footer_branch
    %9 = sbr.rel target = $region3
  $region8: #{dance_conv_block.1} parent=0 // loop_exit
    _

</llo_original>
